<compile_context>
chip_gen: v7x
topology: tpu7x:2x2x1
jax: 0.10.0
libtpu: 0.0.40
codegen_flags: <defaults>
</compile_context>

<pallas_src>
import jax
import jax.numpy as jnp
from jax.experimental import pallas as pl
from jax.experimental.pallas import tpu as pltpu


LANE_W = 512          # lane-dense last dim (multiple of 128)
MAX_TILE_ROWS = 512   # 512 x 512 f32 tile = 1 MiB per buffer


def _round_up(x, m):
    return ((x + m - 1) // m) * m


def _linear_kernel(x_ref, wb_ref, o_ref):
    # x_ref: (tile_rows, LANE_W) VMEM block.
    # wb_ref: (2,) f32 in SMEM -> [weight, bias] scalars (scalar load path).
    w = wb_ref[0]
    b = wb_ref[1]
    o_ref[...] = x_ref[...] * w + b


def linear_forward_pallas(x, weight, bias):
    """y = x @ weight.T + bias for x:(N,1), weight:(1,1), bias:(1,) via Pallas."""
    n, in_f = x.shape
    assert in_f == 1 and weight.shape == (1, 1) and bias.shape == (1,)
    dtype = x.dtype

    # weight & bias as a 2-element scalar array for SMEM.
    wb = jnp.concatenate([weight.reshape(1), bias.reshape(1)]).astype(dtype)

    # Lane-dense slab: flatten, pad to a whole number of (tile_rows, LANE_W)
    # tiles, reshape. Padded elements get computed too (harmless) and are
    # sliced off the output below.
    flat = x.reshape(-1)
    rows = -(-n // LANE_W)                                  # ceil(n / LANE_W)
    tile_rows = min(MAX_TILE_ROWS, _round_up(rows, 8))      # sublane-aligned
    rows_padded = _round_up(rows, tile_rows)
    padded_n = rows_padded * LANE_W
    if padded_n != n:
        flat = jnp.pad(flat, (0, padded_n - n))
    slab = flat.reshape(rows_padded, LANE_W)

    grid = (rows_padded // tile_rows,)

    out = pl.pallas_call(
        _linear_kernel,
        out_shape=jax.ShapeDtypeStruct((rows_padded, LANE_W), dtype),
        grid_spec=pl.GridSpec(
            grid=grid,
            in_specs=[
                pl.BlockSpec((tile_rows, LANE_W), lambda i: (i, 0)),
                pl.BlockSpec(memory_space=pltpu.MemorySpace.SMEM),
            ],
            out_specs=pl.BlockSpec((tile_rows, LANE_W), lambda i: (i, 0)),
        ),
        compiler_params=pltpu.CompilerParams(
            dimension_semantics=("parallel",),
        ),
    )(slab, wb)

    return out.reshape(-1)[:n].reshape(n, 1)


def linear_forward(x, weight, bias, *, min_pallas_batch=4096):
    """Dispatcher: tiny batches go to fused XLA; large batches to Pallas."""
    if x.shape[0] < min_pallas_batch:
        return x @ weight.T + bias
    return linear_forward_pallas(x, weight, bias)


if __name__ == "__main__":
    key = jax.random.PRNGKey(0)
    kx, kw, kb = jax.random.split(key, 3)

    # nn.Linear(1, 1) parameters: weight (1,1), bias (1,).
    weight = jax.random.uniform(kw, (1, 1), dtype=jnp.float32,
                                minval=-1.0, maxval=1.0)
    bias = jax.random.uniform(kb, (1,), dtype=jnp.float32,
                              minval=-1.0, maxval=1.0)

    # Small batch, non-multiple of 128, to exercise the pad/slice path.
    n = 1000
    x = jax.random.normal(kx, (n, 1), dtype=jnp.float32)

    # Exercise the Pallas kernel directly (the dispatcher would route a batch
    # this small to plain XLA).
    y = jax.block_until_ready(linear_forward_pallas(x, weight, bias))

    # Reference: elementwise form is mathematically identical to x @ W.T + b.
    y_ref = x * weight[0, 0] + bias[0]
    assert y.shape == (n, 1)
    assert jnp.allclose(y, y_ref, atol=1e-6, rtol=1e-6)

    # Sanity-check the dispatcher fast path as well.
    x_small = jax.random.normal(kx, (8, 1), dtype=jnp.float32)
    y_small = jax.block_until_ready(linear_forward(x_small, weight, bias))
    assert jnp.allclose(y_small, x_small * weight[0, 0] + bias[0],
                        atol=1e-5, rtol=1e-5)

    print("KERNEL_OK")
</pallas_src>

<mosaic_0001>
module attributes {stable_mosaic.version = 11 : i64} {
  func.func @_linear_kernel(%arg0: i32, %arg1: memref<8x512xf32, #tpu.memory_space<vmem>>, %arg2: memref<2xf32, #tpu.memory_space<smem>>, %arg3: memref<8x512xf32, #tpu.memory_space<vmem>>) attributes {dimension_semantics = [#tpu.dimension_semantics<parallel>], iteration_bounds = array<i64: 1>, scalar_prefetch = 0 : i64, scratch_operands = 0 : i64, tpu.core_type = #tpu.core_type<tc>, window_params = [{transform_indices = @transform_0, window_bounds = array<i64: 8, 512>}, {transform_indices = @transform_1, window_bounds = array<i64: 2>}, {transform_indices = @transform_2, window_bounds = array<i64: 8, 512>}]} {
    %c0 = arith.constant 0 : index
    %0 = memref.load %arg2[%c0] : memref<2xf32, #tpu.memory_space<smem>>
    %c1 = arith.constant 1 : index
    %1 = memref.load %arg2[%c1] : memref<2xf32, #tpu.memory_space<smem>>
    %c0_0 = arith.constant 0 : index
    %c0_1 = arith.constant 0 : index
    %2 = vector.load %arg1[%c0_0, %c0_1] : memref<8x512xf32, #tpu.memory_space<vmem>>, vector<8x512xf32>
    %3 = vector.broadcast %0 : f32 to vector<8x512xf32>
    %4 = arith.mulf %2, %3 : vector<8x512xf32>
    %5 = vector.broadcast %1 : f32 to vector<8x512xf32>
    %6 = arith.addf %4, %5 : vector<8x512xf32>
    %c0_2 = arith.constant 0 : index
    %c0_3 = arith.constant 0 : index
    %7 = vector.load %arg3[%c0_2, %c0_3] : memref<8x512xf32, #tpu.memory_space<vmem>>, vector<8x512xf32>
    tpu.vector_store %arg3[%c0_2, %c0_3], %6 {strides = array<i32>} : memref<8x512xf32, #tpu.memory_space<vmem>>, vector<8x512xf32>,
    return
  }
  func.func @transform_0(%arg0: i32) -> (i32, i32) {
    %c0_i32 = arith.constant 0 : i32
    %c0_i32_0 = arith.constant 0 : i32
    return %arg0, %c0_i32 : i32, i32
  }
  func.func @transform_1(%arg0: i32) -> i32 {
    %c0_i32 = arith.constant 0 : i32
    %c0_i32_0 = arith.constant 0 : i32
    return %c0_i32 : i32
  }
  func.func @transform_2(%arg0: i32) -> (i32, i32) {
    %c0_i32 = arith.constant 0 : i32
    %c0_i32_0 = arith.constant 0 : i32
    return %arg0, %c0_i32 : i32, i32
  }
}

</mosaic_0001>

<llo_original>
// kernel: tpu_custom_call.1
$region0: #{tpu_custom_call.1}
  #allocation0 [shape = 'u32[]', space=smem, size = 0x4, offset = 0x4, fixed_abs, tag = 'smem constant byte address 0x4 - core index']
  #allocation1 [shape = 'u32[144,128]{1,0:T(1,128)}', space=vmem, size = 0x12000, scoped, tag = 'internal scratch']
  %s0 = inlined_call_operand.hbm [shape: f32[8,512], index: 0, kind: input, shape index: {}]
  %s1 = inlined_call_operand.vmem [shape: f32[2], index: 1, kind: input, shape index: {}]
  %s2 = inlined_call_operand.hbm [shape: f32[8,512], index: 2, kind: output, shape index: {}]
  %s3 = sld [smem:[#allocation0]]
  $region26: #{tpu_custom_call.1} parent=0
    _
  %s5 = ssub.s32 1, %s3
  %s6 = scalar_select 0, %s5, %s3
  $region1: #{tpu_custom_call.1} parent=0
    #allocation2 [shape = 'u8[16384]{0}', space=vmem, size = 0x4000, scoped, tag = 'input window, operand 0, single buffered']
    #allocation3 [shape = 's32[1]{0}', space=sflag, size = 0x4, scoped, tag = 'scoped memory for tpu_custom_call.1']
    #allocation4 [shape = 's32[1]{0}', space=sflag, size = 0x4, scoped, tag = 'scoped memory for tpu_custom_call.1']
    #allocation5 [shape = 's32[1]{0}', space=sflag, size = 0x4, scoped, tag = 'scoped memory for tpu_custom_call.1']
    #allocation6 [shape = 'u8[512]{0}', space=smem, size = 0x200, scoped, tag = 'input window, operand 1, single buffered']
    #allocation7 [shape = 'u8[16384]{0}', space=vmem, size = 0x4000, scoped, tag = 'output window, operand 0, single buffered']
    %7 = vsyncpa [#allocation3], 0
    %8 = vsyncpa [#allocation5], 0
    %9 = vsyncpa [#allocation4], 0
    // Predicated region
    $region2: #{tpu_custom_call.1} parent=1 // pred_check
      _
    $region3: #{tpu_custom_call.1} parent=1 // pred_check_branch
      %11 = sbr.rel (0) target = $region5
    $region4: #{tpu_custom_call.1} parent=1 // pred_region
      %s13 = ssub.s32 512, 512
      %14 = vsyncadd [#allocation3], %s13
      %s16 = sshll.u32 [#allocation2], 4
      %s17 = int_to_ptr.vmem [resolvable:$true] %s16
      %19 = dma.hbm_to_vmem [thread:$0]  %s0, 512, %s17, [#allocation3]
    $region5: #{tpu_custom_call.1} parent=1 // pred_fallthru
      _
    // Predicated region
    $region6: #{tpu_custom_call.1} parent=1 // pred_check
      _
    $region7: #{tpu_custom_call.1} parent=1 // pred_check_branch
      %21 = sbr.rel (0) target = $region9
    $region8: #{tpu_custom_call.1} parent=1 // pred_region
      %s23 = ssub.s32 16, 16
      %24 = vsyncadd [#allocation5], %s23
      %s26 = sshll.u32 %s1, 4
      %s27 = int_to_ptr.vmem [resolvable:$true] %s26
      %29 = dma.vmem_to_smem %s27, 16, [#allocation6], [#allocation5]
    $region9: #{tpu_custom_call.1} parent=1 // pred_fallthru
      _
    // Predicated region
    $region10: #{tpu_custom_call.1} parent=1 // pred_check
      _
    $region11: #{tpu_custom_call.1} parent=1 // pred_check_branch
      %31 = sbr.rel (0) target = $region13
    $region12: #{tpu_custom_call.1} parent=1 // pred_region
      %32 = dma.done [#allocation3], 512
    $region13: #{tpu_custom_call.1} parent=1 // pred_fallthru
      _
    // Predicated region
    $region14: #{tpu_custom_call.1} parent=1 // pred_check
      _
    $region15: #{tpu_custom_call.1} parent=1 // pred_check_branch
      %34 = sbr.rel (0) target = $region17
    $region16: #{tpu_custom_call.1} parent=1 // pred_region
      %35 = dma.done [#allocation5], 16
    $region17: #{tpu_custom_call.1} parent=1 // pred_fallthru
      _
    %36 = sfence
    %s37 = sld [smem:[#allocation6]]
    %s38 = sld [smem:[#allocation6 + $0x1]]
    %v39 = vld [vmem:[#allocation2] sm:$0xff]
    %v40 = vld [vmem:[#allocation2 + $0x8] sm:$0xff]
    %v41 = vld [vmem:[#allocation2 + $0x10] sm:$0xff]
    %v42 = vld [vmem:[#allocation2 + $0x18] sm:$0xff]
    %v43 = vstv %s37
    %v44 = vmul.f32 %v39, %v43
    %v45 = vmul.f32 %v40, %v43
    %v46 = vmul.f32 %v41, %v43
    %v47 = vmul.f32 %v42, %v43
    %v48 = vstv %s38
    %v49 = vadd.f32 %v44, %v48
    %v50 = vadd.f32 %v45, %v48
    %v51 = vadd.f32 %v46, %v48
    %v52 = vadd.f32 %v47, %v48
    %53 = vst [vmem:[#allocation7] sm:$0xff] %v49
    %54 = vst [vmem:[#allocation7 + $0x8] sm:$0xff] %v50
    %55 = vst [vmem:[#allocation7 + $0x10] sm:$0xff] %v51
    %56 = vst [vmem:[#allocation7 + $0x18] sm:$0xff] %v52
    // Predicated region
    $region18: #{tpu_custom_call.1} parent=1 // pred_check
      _
    $region19: #{tpu_custom_call.1} parent=1 // pred_check_branch
      %58 = sbr.rel (0) target = $region21
    $region20: #{tpu_custom_call.1} parent=1 // pred_region
      %s60 = ssub.s32 512, 512
      %61 = vsyncadd [#allocation4], %s60
      %s63 = sshll.u32 [#allocation7], 4
      %s64 = int_to_ptr.vmem [resolvable:$true] %s63
      %66 = dma.vmem_to_hbm [thread:$0]  %s64, 512, %s2, [#allocation4]
    $region21: #{tpu_custom_call.1} parent=1 // pred_fallthru
      _
    // Predicated region
    $region22: #{tpu_custom_call.1} parent=1 // pred_check
      _
    $region23: #{tpu_custom_call.1} parent=1 // pred_check_branch
      %68 = sbr.rel (0) target = $region25
    $region24: #{tpu_custom_call.1} parent=1 // pred_region
      %69 = dma.done [#allocation4], 512
    $region25: #{tpu_custom_call.1} parent=1 // pred_fallthru
      _
    %70 = vsyncpa [#allocation3], 1
    %71 = vsyncpa [#allocation4], 1
    %72 = vsyncpa [#allocation5], 1

</llo_original>
